<compile_context>
chip_gen: v7x
topology: tpu7x:2x2x1
jax: 0.10.0
libtpu: 0.0.40
codegen_flags: <defaults>
</compile_context>

<pallas_src>
import functools

import jax
import jax.numpy as jnp
import numpy as np
from jax.experimental import pallas as pl
from jax.experimental.pallas import tpu as pltpu


def _round_up(x, m):
    return ((x + m - 1) // m) * m


def _gaussian_policy_kernel(x_ref, w1_ref, b1_ref, w2_ref, b2_ref,
                            wmu_ref, bmu_ref, mu_ref):
    # Layer 1: bf16 x bf16 matmul on the MXU, f32 accumulate; bias + tanh in f32.
    h1 = jnp.tanh(
        jnp.dot(x_ref[...], w1_ref[...], preferred_element_type=jnp.float32)
        + b1_ref[...]
    )
    # Layer 2: cast activations to bf16 only for the MXU input.
    h2 = jnp.tanh(
        jnp.dot(h1.astype(jnp.bfloat16), w2_ref[...],
                preferred_element_type=jnp.float32)
        + b2_ref[...]
    )
    # mu head (no activation); output is lane-padded to 128 columns.
    mu_ref[...] = (
        jnp.dot(h2.astype(jnp.bfloat16), wmu_ref[...],
                preferred_element_type=jnp.float32)
        + bmu_ref[...]
    )


@functools.partial(jax.jit, static_argnames=())
def gaussian_policy_forward(state, params):
    """Pallas-accelerated forward pass. Returns (mu, log_std)."""
    w1, b1, w2, b2, wmu, bmu, log_std = params
    batch = state.shape[0]
    action_dim = log_std.shape[0]
    s_dim = w1.shape[0]
    a_pad = wmu.shape[1]

    # MXU-aligned batch tile.  Large batches: 256 rows/step (full MXU M dim on
    # v6e/v7x, 2x passes on v5e).  Small batches: a single sublane-aligned step.
    if batch >= 256:
        tm = 256
    else:
        tm = _round_up(batch, 8)
    b_pad = _round_up(batch, tm)

    x = state.astype(jnp.bfloat16)
    if b_pad != batch:
        x = jnp.pad(x, ((0, b_pad - batch), (0, 0)))

    def resident(arr):
        # Whole weight/bias array kept in VMEM for every grid step (no re-fetch).
        return pl.BlockSpec(arr.shape, lambda i: (0, 0))

    mu_pad = pl.pallas_call(
        _gaussian_policy_kernel,
        out_shape=jax.ShapeDtypeStruct((b_pad, a_pad), jnp.float32),
        grid=(b_pad // tm,),
        in_specs=[
            pl.BlockSpec((tm, s_dim), lambda i: (i, 0)),   # state rows (pipelined)
            resident(w1), resident(b1),
            resident(w2), resident(b2),
            resident(wmu), resident(bmu),
        ],
        out_specs=pl.BlockSpec((tm, a_pad), lambda i: (i, 0)),
        compiler_params=pltpu.CompilerParams(
            dimension_semantics=("parallel",)),
    )(x, w1, b1, w2, b2, wmu, bmu)

    mu = mu_pad[:batch, :action_dim]
    # state_independent_log_std=True: log_std is a parameter, returned as-is.
    return mu, log_std


def init_params(key, state_dim, hidden_sizes, action_dim, std_init=0.606):
    """Deterministic init (PyTorch-Linear-style uniform bounds), lane-padded.

    Weights stored bf16 (MXU inputs), biases f32.  Padded rows/cols are exact
    zeros so the padded lanes carry tanh(0)=0 and contribute nothing downstream.
    """
    h1, h2 = hidden_sizes
    h1p = _round_up(h1, 128)
    h2p = _round_up(h2, 128)
    ap = _round_up(action_dim, 128)

    def linear(key, fan_in, fan_out, in_pad, out_pad):
        kw, kb = jax.random.split(key)
        bound = 1.0 / np.sqrt(fan_in)
        # stored as (in, out) so the kernel computes x @ W + b
        w = jax.random.uniform(kw, (fan_in, fan_out), jnp.float32, -bound, bound)
        b = jax.random.uniform(kb, (1, fan_out), jnp.float32, -bound, bound)
        w = jnp.pad(w, ((0, in_pad - fan_in), (0, out_pad - fan_out)))
        b = jnp.pad(b, ((0, 0), (0, out_pad - fan_out)))
        return w.astype(jnp.bfloat16), b.astype(jnp.float32)

    k1, k2, k3 = jax.random.split(key, 3)
    w1, b1 = linear(k1, state_dim, h1, state_dim, h1p)
    w2, b2 = linear(k2, h1, h2, h1p, h2p)
    wmu, bmu = linear(k3, h2, action_dim, h2p, ap)
    log_std = jnp.full((action_dim,), np.log(std_init), dtype=jnp.float32)
    return (w1, b1, w2, b2, wmu, bmu, log_std)


def reference_forward_bf16(state, params):
    """JAX reference that mirrors the kernel's bf16-MXU / f32-accumulate math."""
    w1, b1, w2, b2, wmu, bmu, log_std = params
    action_dim = log_std.shape[0]
    x = state.astype(jnp.bfloat16)
    h1 = jnp.tanh(jnp.dot(x, w1, preferred_element_type=jnp.float32) + b1)
    h2 = jnp.tanh(jnp.dot(h1.astype(jnp.bfloat16), w2,
                          preferred_element_type=jnp.float32) + b2)
    mu = jnp.dot(h2.astype(jnp.bfloat16), wmu,
                 preferred_element_type=jnp.float32) + bmu
    return mu[:, :action_dim], log_std


def reference_forward_f32(state, params):
    """Full-f32 reference (module semantics) for a loose sanity check."""
    w1, b1, w2, b2, wmu, bmu, log_std = params
    action_dim = log_std.shape[0]
    w1, w2, wmu = (w1.astype(jnp.float32), w2.astype(jnp.float32),
                   wmu.astype(jnp.float32))
    h1 = jnp.tanh(state @ w1 + b1)
    h2 = jnp.tanh(h1 @ w2 + b2)
    mu = h2 @ wmu + bmu
    return mu[:, :action_dim], log_std


if __name__ == "__main__":
    # Shapes consistent with the module: env_dim = {'states': 16, 'actions': 4},
    # hidden_sizes=(400, 300).
    state_dim = 16
    hidden_sizes = (400, 300)
    action_dim = 4

    key = jax.random.PRNGKey(0)
    k_params, k_small, k_big = jax.random.split(key, 3)
    params = init_params(k_params, state_dim, hidden_sizes, action_dim)

    # --- small batch (single grid step) ---
    batch = 8
    state = jax.random.normal(k_small, (batch, state_dim), dtype=jnp.float32)
    mu, log_std = gaussian_policy_forward(state, params)
    mu = jax.block_until_ready(mu)
    log_std = jax.block_until_ready(log_std)

    assert mu.shape == (batch, action_dim)
    assert log_std.shape == (action_dim,)

    mu_ref, log_std_ref = reference_forward_bf16(state, params)
    np.testing.assert_allclose(np.asarray(mu), np.asarray(mu_ref),
                               rtol=1e-3, atol=1e-3)
    mu_f32, _ = reference_forward_f32(state, params)
    np.testing.assert_allclose(np.asarray(mu), np.asarray(mu_f32),
                               rtol=5e-2, atol=5e-2)
    np.testing.assert_allclose(np.asarray(log_std), np.asarray(log_std_ref),
                               rtol=0, atol=0)

    # --- larger batch exercising the 256-row grid, padding and parallel axis ---
    batch2 = 300
    state2 = jax.random.normal(k_big, (batch2, state_dim), dtype=jnp.float32)
    mu2, _ = gaussian_policy_forward(state2, params)
    mu2 = jax.block_until_ready(mu2)
    mu2_ref, _ = reference_forward_bf16(state2, params)
    assert mu2.shape == (batch2, action_dim)
    np.testing.assert_allclose(np.asarray(mu2), np.asarray(mu2_ref),
                               rtol=1e-3, atol=1e-3)

    print("KERNEL_OK")
</pallas_src>

<mosaic_0001>
module attributes {stable_mosaic.version = 11 : i64} {
  func.func @_gaussian_policy_kernel(%arg0: i32, %arg1: memref<8x16xbf16, #tpu.memory_space<vmem>>, %arg2: memref<16x512xbf16, #tpu.memory_space<vmem>>, %arg3: memref<1x512xf32, #tpu.memory_space<vmem>>, %arg4: memref<512x384xbf16, #tpu.memory_space<vmem>>, %arg5: memref<1x384xf32, #tpu.memory_space<vmem>>, %arg6: memref<384x128xbf16, #tpu.memory_space<vmem>>, %arg7: memref<1x128xf32, #tpu.memory_space<vmem>>, %arg8: memref<8x128xf32, #tpu.memory_space<vmem>>) attributes {dimension_semantics = [#tpu.dimension_semantics<parallel>], iteration_bounds = array<i64: 1>, scalar_prefetch = 0 : i64, scratch_operands = 0 : i64, tpu.core_type = #tpu.core_type<tc>, window_params = [{transform_indices = @transform_0, window_bounds = array<i64: 8, 16>}, {pipeline_mode = #tpu.pipeline_mode<synchronous>, transform_indices = @transform_1, window_bounds = array<i64: 16, 512>}, {pipeline_mode = #tpu.pipeline_mode<synchronous>, transform_indices = @transform_2, window_bounds = array<i64: 1, 512>}, {pipeline_mode = #tpu.pipeline_mode<synchronous>, transform_indices = @transform_3, window_bounds = array<i64: 512, 384>}, {pipeline_mode = #tpu.pipeline_mode<synchronous>, transform_indices = @transform_4, window_bounds = array<i64: 1, 384>}, {pipeline_mode = #tpu.pipeline_mode<synchronous>, transform_indices = @transform_5, window_bounds = array<i64: 384, 128>}, {pipeline_mode = #tpu.pipeline_mode<synchronous>, transform_indices = @transform_6, window_bounds = array<i64: 1, 128>}, {transform_indices = @transform_7, window_bounds = array<i64: 8, 128>}]} {
    %c0 = arith.constant 0 : index
    %c0_0 = arith.constant 0 : index
    %0 = vector.load %arg1[%c0, %c0_0] : memref<8x16xbf16, #tpu.memory_space<vmem>>, vector<8x16xbf16>
    %c0_1 = arith.constant 0 : index
    %c0_2 = arith.constant 0 : index
    %1 = vector.load %arg2[%c0_1, %c0_2] : memref<16x512xbf16, #tpu.memory_space<vmem>>, vector<16x512xbf16>
    %cst = arith.constant dense<0.000000e+00> : vector<8x512xf32>
    %2 = tpu.matmul %0, %1, %cst {dimension_numbers = #tpu.dot_dimension_numbers<[1], [0], [0], [1], [0, 0, 1, 1], [], []>} : vector<8x16xbf16>, vector<16x512xbf16>, vector<8x512xf32> -> vector<8x512xf32>
    %c0_3 = arith.constant 0 : index
    %c0_4 = arith.constant 0 : index
    %3 = vector.load %arg3[%c0_3, %c0_4] : memref<1x512xf32, #tpu.memory_space<vmem>>, vector<1x512xf32>
    %4 = vector.broadcast %3 : vector<1x512xf32> to vector<8x512xf32>
    %5 = arith.addf %2, %4 : vector<8x512xf32>
    %6 = math.tanh %5 : vector<8x512xf32>
    %7 = arith.truncf %6 : vector<8x512xf32> to vector<8x512xbf16>
    %c0_5 = arith.constant 0 : index
    %c0_6 = arith.constant 0 : index
    %8 = vector.load %arg4[%c0_5, %c0_6] : memref<512x384xbf16, #tpu.memory_space<vmem>>, vector<512x384xbf16>
    %cst_7 = arith.constant dense<0.000000e+00> : vector<8x384xf32>
    %9 = tpu.matmul %7, %8, %cst_7 {dimension_numbers = #tpu.dot_dimension_numbers<[1], [0], [0], [1], [0, 0, 1, 1], [], []>} : vector<8x512xbf16>, vector<512x384xbf16>, vector<8x384xf32> -> vector<8x384xf32>
    %c0_8 = arith.constant 0 : index
    %c0_9 = arith.constant 0 : index
    %10 = vector.load %arg5[%c0_8, %c0_9] : memref<1x384xf32, #tpu.memory_space<vmem>>, vector<1x384xf32>
    %11 = vector.broadcast %10 : vector<1x384xf32> to vector<8x384xf32>
    %12 = arith.addf %9, %11 : vector<8x384xf32>
    %13 = math.tanh %12 : vector<8x384xf32>
    %14 = arith.truncf %13 : vector<8x384xf32> to vector<8x384xbf16>
    %c0_10 = arith.constant 0 : index
    %c0_11 = arith.constant 0 : index
    %15 = vector.load %arg6[%c0_10, %c0_11] : memref<384x128xbf16, #tpu.memory_space<vmem>>, vector<384x128xbf16>
    %cst_12 = arith.constant dense<0.000000e+00> : vector<8x128xf32>
    %16 = tpu.matmul %14, %15, %cst_12 {dimension_numbers = #tpu.dot_dimension_numbers<[1], [0], [0], [1], [0, 0, 1, 1], [], []>} : vector<8x384xbf16>, vector<384x128xbf16>, vector<8x128xf32> -> vector<8x128xf32>
    %c0_13 = arith.constant 0 : index
    %c0_14 = arith.constant 0 : index
    %17 = vector.load %arg7[%c0_13, %c0_14] : memref<1x128xf32, #tpu.memory_space<vmem>>, vector<1x128xf32>
    %18 = vector.broadcast %17 : vector<1x128xf32> to vector<8x128xf32>
    %19 = arith.addf %16, %18 : vector<8x128xf32>
    %c0_15 = arith.constant 0 : index
    %c0_16 = arith.constant 0 : index
    %20 = vector.load %arg8[%c0_15, %c0_16] : memref<8x128xf32, #tpu.memory_space<vmem>>, vector<8x128xf32>
    tpu.vector_store %arg8[%c0_15, %c0_16], %19 {strides = array<i32>} : memref<8x128xf32, #tpu.memory_space<vmem>>, vector<8x128xf32>,
    return
  }
  func.func @transform_0(%arg0: i32) -> (i32, i32) {
    %c0_i32 = arith.constant 0 : i32
    %c0_i32_0 = arith.constant 0 : i32
    return %arg0, %c0_i32 : i32, i32
  }
  func.func @transform_1(%arg0: i32) -> (i32, i32) {
    %c0_i32 = arith.constant 0 : i32
    %c0_i32_0 = arith.constant 0 : i32
    %c0_i32_1 = arith.constant 0 : i32
    return %c0_i32, %c0_i32_0 : i32, i32
  }
  func.func @transform_2(%arg0: i32) -> (i32, i32) {
    %c0_i32 = arith.constant 0 : i32
    %c0_i32_0 = arith.constant 0 : i32
    %c0_i32_1 = arith.constant 0 : i32
    return %c0_i32, %c0_i32_0 : i32, i32
  }
  func.func @transform_3(%arg0: i32) -> (i32, i32) {
    %c0_i32 = arith.constant 0 : i32
    %c0_i32_0 = arith.constant 0 : i32
    %c0_i32_1 = arith.constant 0 : i32
    return %c0_i32, %c0_i32_0 : i32, i32
  }
  func.func @transform_4(%arg0: i32) -> (i32, i32) {
    %c0_i32 = arith.constant 0 : i32
    %c0_i32_0 = arith.constant 0 : i32
    %c0_i32_1 = arith.constant 0 : i32
    return %c0_i32, %c0_i32_0 : i32, i32
  }
  func.func @transform_5(%arg0: i32) -> (i32, i32) {
    %c0_i32 = arith.constant 0 : i32
    %c0_i32_0 = arith.constant 0 : i32
    %c0_i32_1 = arith.constant 0 : i32
    return %c0_i32, %c0_i32_0 : i32, i32
  }
  func.func @transform_6(%arg0: i32) -> (i32, i32) {
    %c0_i32 = arith.constant 0 : i32
    %c0_i32_0 = arith.constant 0 : i32
    %c0_i32_1 = arith.constant 0 : i32
    return %c0_i32, %c0_i32_0 : i32, i32
  }
  func.func @transform_7(%arg0: i32) -> (i32, i32) {
    %c0_i32 = arith.constant 0 : i32
    %c0_i32_0 = arith.constant 0 : i32
    return %arg0, %c0_i32 : i32, i32
  }
}

</mosaic_0001>

<llo_original>
// kernel: gaussian_policy_forward.1
$region0: #{gaussian_policy_forward.1}
  #allocation0 [shape = 'u32[]', space=smem, size = 0x4, offset = 0x4, fixed_abs, tag = 'smem constant byte address 0x4 - core index']
  #allocation1 [shape = 'u32[144,128]{1,0:T(1,128)}', space=vmem, size = 0x12000, scoped, tag = 'internal scratch']
  %s0 = inlined_call_operand.vmem [shape: bf16[8,16], index: 0, kind: input, shape index: {}]
  %s1 = inlined_call_operand.vmem [shape: bf16[16,512], index: 1, kind: input, shape index: {}]
  %s2 = inlined_call_operand.hbm [shape: f32[1,512], index: 2, kind: input, shape index: {}]
  %s3 = inlined_call_operand.hbm [shape: bf16[512,384], index: 3, kind: input, shape index: {}]
  %s4 = inlined_call_operand.hbm [shape: f32[1,384], index: 4, kind: input, shape index: {}]
  %s5 = inlined_call_operand.hbm [shape: bf16[384,128], index: 5, kind: input, shape index: {}]
  %s6 = inlined_call_operand.vmem [shape: f32[1,128], index: 6, kind: input, shape index: {}]
  %s7 = inlined_call_operand.vmem [shape: f32[8,128], index: 7, kind: output, shape index: {}]
  %s8 = sld [smem:[#allocation0]]
  $region54: #{gaussian_policy_forward.1} parent=0
    _
  %s10 = ssub.s32 1, %s8
  %s11 = scalar_select 0, %s10, %s8
  $region1: #{gaussian_policy_forward.1} parent=0
    #allocation2 [shape = 'u8[2048]{0}', space=vmem, size = 0x800, scoped, tag = 'input window, operand 2, single buffered']
    #allocation3 [shape = 's32[1]{0}', space=sflag, size = 0x4, scoped, tag = 'scoped memory for gaussian_policy_forward.1']
    #allocation4 [shape = 'u8[393216]{0}', space=vmem, size = 0x60000, scoped, tag = 'input window, operand 3, single buffered']
    #allocation5 [shape = 's32[1]{0}', space=sflag, size = 0x4, scoped, tag = 'scoped memory for gaussian_policy_forward.1']
    #allocation6 [shape = 'u8[1536]{0}', space=vmem, size = 0x800, scoped, tag = 'input window, operand 4, single buffered']
    #allocation7 [shape = 'u8[98304]{0}', space=vmem, size = 0x18000, scoped, tag = 'input window, operand 5, single buffered']
    #allocation8 [shape = 's32[1]{0}', space=sflag, size = 0x4, scoped, tag = 'scoped memory for gaussian_policy_forward.1']
    %12 = vsyncpa [#allocation3], 0
    %13 = vsyncpa [#allocation5], 0
    %14 = vsyncpa [#allocation8], 0
    // Predicated region
    $region2: #{gaussian_policy_forward.1} parent=1 // pred_check
      _
    $region3: #{gaussian_policy_forward.1} parent=1 // pred_check_branch
      %16 = sbr.rel (0) target = $region5
    $region4: #{gaussian_policy_forward.1} parent=1 // pred_region
      _
    $region5: #{gaussian_policy_forward.1} parent=1 // pred_fallthru
      _
    // Predicated region
    $region6: #{gaussian_policy_forward.1} parent=1 // pred_check
      _
    $region7: #{gaussian_policy_forward.1} parent=1 // pred_check_branch
      %18 = sbr.rel (0) target = $region9
    $region8: #{gaussian_policy_forward.1} parent=1 // pred_region
      _
    $region9: #{gaussian_policy_forward.1} parent=1 // pred_fallthru
      _
    // Predicated region
    $region10: #{gaussian_policy_forward.1} parent=1 // pred_check
      _
    $region11: #{gaussian_policy_forward.1} parent=1 // pred_check_branch
      %20 = sbr.rel (0) target = $region13
    $region12: #{gaussian_policy_forward.1} parent=1 // pred_region
      %s22 = ssub.s32 64, 64
      %23 = vsyncadd [#allocation3], %s22
      %s25 = sshll.u32 [#allocation2], 4
      %s26 = int_to_ptr.vmem [resolvable:$true] %s25
      %28 = dma.hbm_to_vmem [thread:$0]  %s2, 64, %s26, [#allocation3]
    $region13: #{gaussian_policy_forward.1} parent=1 // pred_fallthru
      _
    // Predicated region
    $region14: #{gaussian_policy_forward.1} parent=1 // pred_check
      _
    $region15: #{gaussian_policy_forward.1} parent=1 // pred_check_branch
      %30 = sbr.rel (0) target = $region17
    $region16: #{gaussian_policy_forward.1} parent=1 // pred_region
      %s32 = ssub.s32 12288, 12288
      %33 = vsyncadd [#allocation5], %s32
      %s34 = sshll.u32 [#allocation4], 4
      %s35 = int_to_ptr.vmem [resolvable:$true] %s34
      %40 = dma.hbm_to_vmem [thread:$0]  %s3, 12288, %s35, [#allocation5], 192, 192, 12
    $region17: #{gaussian_policy_forward.1} parent=1 // pred_fallthru
      _
    // Predicated region
    $region18: #{gaussian_policy_forward.1} parent=1 // pred_check
      _
    $region19: #{gaussian_policy_forward.1} parent=1 // pred_check_branch
      %42 = sbr.rel (0) target = $region21
    $region20: #{gaussian_policy_forward.1} parent=1 // pred_region
      %s44 = ssub.s32 48, 48
      %45 = vsyncadd [#allocation5], %s44
      %s47 = sshll.u32 [#allocation6], 4
      %s48 = int_to_ptr.vmem [resolvable:$true] %s47
      %50 = dma.hbm_to_vmem [thread:$0]  %s4, 48, %s48, [#allocation5]
    $region21: #{gaussian_policy_forward.1} parent=1 // pred_fallthru
      _
    // Predicated region
    $region22: #{gaussian_policy_forward.1} parent=1 // pred_check
      _
    $region23: #{gaussian_policy_forward.1} parent=1 // pred_check_branch
      %52 = sbr.rel (0) target = $region25
    $region24: #{gaussian_policy_forward.1} parent=1 // pred_region
      %s54 = ssub.s32 3072, 3072
      %55 = vsyncadd [#allocation8], %s54
      %s56 = sshll.u32 [#allocation7], 4
      %s57 = int_to_ptr.vmem [resolvable:$true] %s56
      %62 = dma.hbm_to_vmem [thread:$0]  %s5, 3072, %s57, [#allocation8], 64, 64, 4
    $region25: #{gaussian_policy_forward.1} parent=1 // pred_fallthru
      _
    // Predicated region
    $region26: #{gaussian_policy_forward.1} parent=1 // pred_check
      _
    $region27: #{gaussian_policy_forward.1} parent=1 // pred_check_branch
      %64 = sbr.rel (0) target = $region29
    $region28: #{gaussian_policy_forward.1} parent=1 // pred_region
      _
    $region29: #{gaussian_policy_forward.1} parent=1 // pred_fallthru
      _
    // Predicated region
    $region30: #{gaussian_policy_forward.1} parent=1 // pred_check
      _
    $region31: #{gaussian_policy_forward.1} parent=1 // pred_check_branch
      %66 = sbr.rel (0) target = $region33
    $region32: #{gaussian_policy_forward.1} parent=1 // pred_region
      %67 = dma.done [#allocation3], 64
    $region33: #{gaussian_policy_forward.1} parent=1 // pred_fallthru
      _
    // Predicated region
    $region34: #{gaussian_policy_forward.1} parent=1 // pred_check
      _
    $region35: #{gaussian_policy_forward.1} parent=1 // pred_check_branch
      %69 = sbr.rel (0) target = $region37
    $region36: #{gaussian_policy_forward.1} parent=1 // pred_region
      %70 = dma.done [#allocation5], 12288
    $region37: #{gaussian_policy_forward.1} parent=1 // pred_fallthru
      _
    // Predicated region
    $region38: #{gaussian_policy_forward.1} parent=1 // pred_check
      _
    $region39: #{gaussian_policy_forward.1} parent=1 // pred_check_branch
      %72 = sbr.rel (0) target = $region41
    $region40: #{gaussian_policy_forward.1} parent=1 // pred_region
      %73 = dma.done [#allocation5], 48
    $region41: #{gaussian_policy_forward.1} parent=1 // pred_fallthru
      _
    // Predicated region
    $region42: #{gaussian_policy_forward.1} parent=1 // pred_check
      _
    $region43: #{gaussian_policy_forward.1} parent=1 // pred_check_branch
      %75 = sbr.rel (0) target = $region45
    $region44: #{gaussian_policy_forward.1} parent=1 // pred_region
      %76 = dma.done [#allocation8], 3072
    $region45: #{gaussian_policy_forward.1} parent=1 // pred_fallthru
      _
    %v78 = vld [vmem:[%s0] sm:$0xf]
    %v79 = vld [vmem:[%s1] sm:$0xff]
    %v80 = vld [vmem:[%s1 + $0x8] sm:$0xff]
    %v81 = vld [vmem:[%s1 + $0x10] sm:$0xff]
    %v82 = vld [vmem:[%s1 + $0x18] sm:$0xff]
    %v83 = vld [vmem:[#allocation2] sm:$0xf]
    %v85 = vlaneseq
    %v86 = vshrl.u32 %v85, 7
    %v87 = vsub.s32 0, %v86
    %v88 = vrot.slane %v83, %v87
    %v89 = vlaneseq
    %v90 = vshrl.u32 %v89, 7
    %v91 = vsub.s32 1, %v90
    %v92 = vrot.slane %v83, %v91
    %v93 = vlaneseq
    %v94 = vshrl.u32 %v93, 7
    %v95 = vsub.s32 2, %v94
    %v96 = vrot.slane %v83, %v95
    %v97 = vlaneseq
    %v98 = vshrl.u32 %v97, 7
    %v99 = vsub.s32 3, %v98
    %v100 = vrot.slane %v83, %v99
    %v109 = vunpack.c.l.b16 %v79
    %v110 = vunpack.c.h.b16 %v79
    %v111 = vunpack.c.l.b16 %v80
    %v112 = vunpack.c.h.b16 %v80
    %v113 = vunpack.c.l.b16 %v81
    %v114 = vunpack.c.h.b16 %v81
    %v115 = vunpack.c.l.b16 %v82
    %v116 = vunpack.c.h.b16 %v82
    %v117 = vpack.c.b16 %v113, %v109
    %v118 = vpack.c.b16 %v114, %v110
    %v119 = vpack.c.b16 %v115, %v111
    %v120 = vpack.c.b16 %v116, %v112
    %vm125 = vcmask 130048
    %v127 = vsel %vm125, %v78, 0
    %129 = vmatprep.subr.bf16.mxu0 %v118
    %130 = vmatpush1.bf16.msra.mxu0 %v117
    %131 = vmatprep.subr.bf16.mxu0 0
    %132 = vmatpush1.bf16.msra.mxu0 0
    %133 = vmatprep.subr.bf16.mxu0 0
    %134 = vmatpush1.bf16.msra.mxu0 0
    %135 = vmatprep.subr.bf16.mxu0 0
    %136 = vmatpush1.bf16.msra.mxu0 0
    %137 = vmatprep.subr.bf16.mxu0 0
    %138 = vmatpush1.bf16.msra.mxu0 0
    %139 = vmatprep.subr.bf16.mxu0 0
    %140 = vmatpush1.bf16.msra.mxu0 0
    %141 = vmatprep.subr.bf16.mxu0 0
    %142 = vmatpush1.bf16.msra.mxu0 0
    %143 = vmatprep.subr.bf16.mxu0 0
    %144 = vmatpush1.bf16.msra.mxu0 0
    %145 = vmatprep.subr.bf16.mxu0 0
    %146 = vmatpush1.bf16.msra.mxu0 0
    %147 = vmatprep.subr.bf16.mxu0 0
    %148 = vmatpush1.bf16.msra.mxu0 0
    %149 = vmatprep.subr.bf16.mxu0 0
    %150 = vmatpush1.bf16.msra.mxu0 0
    %151 = vmatprep.subr.bf16.mxu0 0
    %152 = vmatpush1.bf16.msra.mxu0 0
    %153 = vmatprep.subr.bf16.mxu0 0
    %154 = vmatpush1.bf16.msra.mxu0 0
    %155 = vmatprep.subr.bf16.mxu0 0
    %156 = vmatpush1.bf16.msra.mxu0 0
    %157 = vmatprep.subr.bf16.mxu0 0
    %158 = vmatpush1.bf16.msra.mxu0 0
    %159 = vmatprep.subr.bf16.mxu0 0
    %160 = vmatpush1.bf16.msra.mxu0 0
    %161 = vmatprep.mubr.bf16.mxu0 0
    %162 = vmatmul.mubr.bf16.gmra.mrb[0].mxu0 %v127
    %v163 = vpop.f32.mrb[0].mxu0
    %v164 = vadd.f32 %v88, %v163
    %v165 = vpop.f32.mrb[0].mxu0
    %v166 = vadd.f32 %v92, %v165
    %v167 = vpop.f32.mrb[0].mxu0
    %v168 = vpop.f32.mrb[0].mxu0
    %169 = vdwg.mxu0
    %170 = vmatprep.subr.bf16.mxu0 %v120
    %171 = vmatpush1.bf16.msra.mxu0 %v119
    %172 = vmatprep.subr.bf16.mxu0 0
    %173 = vmatpush1.bf16.msra.mxu0 0
    %174 = vmatprep.subr.bf16.mxu0 0
    %175 = vmatpush1.bf16.msra.mxu0 0
    %176 = vmatprep.subr.bf16.mxu0 0
    %177 = vmatpush1.bf16.msra.mxu0 0
    %178 = vmatprep.subr.bf16.mxu0 0
    %179 = vmatpush1.bf16.msra.mxu0 0
    %180 = vmatprep.subr.bf16.mxu0 0
    %181 = vmatpush1.bf16.msra.mxu0 0
    %182 = vmatprep.subr.bf16.mxu0 0
    %183 = vmatpush1.bf16.msra.mxu0 0
    %184 = vmatprep.subr.bf16.mxu0 0
    %185 = vmatpush1.bf16.msra.mxu0 0
    %186 = vmatprep.subr.bf16.mxu0 0
    %187 = vmatpush1.bf16.msra.mxu0 0
    %188 = vmatprep.subr.bf16.mxu0 0
    %189 = vmatpush1.bf16.msra.mxu0 0
    %190 = vmatprep.subr.bf16.mxu0 0
    %191 = vmatpush1.bf16.msra.mxu0 0
    %192 = vmatprep.subr.bf16.mxu0 0
    %193 = vmatpush1.bf16.msra.mxu0 0
    %194 = vmatprep.subr.bf16.mxu0 0
    %195 = vmatpush1.bf16.msra.mxu0 0
    %196 = vmatprep.subr.bf16.mxu0 0
    %197 = vmatpush1.bf16.msra.mxu0 0
    %198 = vmatprep.subr.bf16.mxu0 0
    %199 = vmatpush1.bf16.msra.mxu0 0
    %200 = vmatprep.subr.bf16.mxu0 0
    %201 = vmatpush1.bf16.msra.mxu0 0
    %202 = vmatprep.mubr.bf16.mxu0 0
    %203 = vmatmul.mubr.bf16.gmra.mrb[0].mxu0 %v127
    %v204 = vpop.f32.mrb[0].mxu0
    %v205 = vadd.f32 %v96, %v204
    %v206 = vpop.f32.mrb[0].mxu0
    %v207 = vadd.f32 %v100, %v206
    %v208 = vpop.f32.mrb[0].mxu0
    %v209 = vpop.f32.mrb[0].mxu0
    %210 = vdwg.mxu0
    %v211 = vtanh.pop %v164
    %v212 = vtanh.pop %v166
    %v213 = vtanh.pop %v205
    %v214 = vtanh.pop %v207
    %v215 = vpack.c.bf16 %v211, %v211
    %v216 = vpack.c.bf16 %v212, %v212
    %v217 = vpack.c.bf16 %v213, %v213
    %v218 = vpack.c.bf16 %v214, %v214
    %v219 = vld [vmem:[#allocation4] sm:$0xff]
    %v220 = vld [vmem:[#allocation4 + $0x8] sm:$0xf]
    %v221 = vld [vmem:[#allocation4 + $0xc] sm:$0xff]
    %v222 = vld [vmem:[#allocation4 + $0x14] sm:$0xf]
    %v223 = vld [vmem:[#allocation4 + $0x18] sm:$0xff]
    %v224 = vld [vmem:[#allocation4 + $0x20] sm:$0xf]
    %v225 = vld [vmem:[#allocation4 + $0x24] sm:$0xff]
    %v226 = vld [vmem:[#allocation4 + $0x2c] sm:$0xf]
    %v227 = vld [vmem:[#allocation4 + $0x30] sm:$0xff]
    %v228 = vld [vmem:[#allocation4 + $0x38] sm:$0xf]
    %v229 = vld [vmem:[#allocation4 + $0x3c] sm:$0xff]
    %v230 = vld [vmem:[#allocation4 + $0x44] sm:$0xf]
    %v231 = vld [vmem:[#allocation4 + $0x48] sm:$0xff]
    %v232 = vld [vmem:[#allocation4 + $0x50] sm:$0xf]
    %v233 = vld [vmem:[#allocation4 + $0x54] sm:$0xff]
    %v234 = vld [vmem:[#allocation4 + $0x5c] sm:$0xf]
    %v235 = vld [vmem:[#allocation4 + $0x60] sm:$0xff]
    %v236 = vld [vmem:[#allocation4 + $0x68] sm:$0xf]
    %v237 = vld [vmem:[#allocation4 + $0x6c] sm:$0xff]
    %v238 = vld [vmem:[#allocation4 + $0x74] sm:$0xf]
    %v239 = vld [vmem:[#allocation4 + $0x78] sm:$0xff]
    %v240 = vld [vmem:[#allocation4 + $0x80] sm:$0xf]
    %v241 = vld [vmem:[#allocation4 + $0x84] sm:$0xff]
    %v242 = vld [vmem:[#allocation4 + $0x8c] sm:$0xf]
    %v243 = vld [vmem:[#allocation4 + $0x90] sm:$0xff]
    %v244 = vld [vmem:[#allocation4 + $0x98] sm:$0xf]
    %v245 = vld [vmem:[#allocation4 + $0x9c] sm:$0xff]
    %v246 = vld [vmem:[#allocation4 + $0xa4] sm:$0xf]
    %v247 = vld [vmem:[#allocation4 + $0xa8] sm:$0xff]
    %v248 = vld [vmem:[#allocation4 + $0xb0] sm:$0xf]
    %v249 = vld [vmem:[#allocation4 + $0xb4] sm:$0xff]
    %v250 = vld [vmem:[#allocation4 + $0xbc] sm:$0xf]
    %v251 = vld [vmem:[#allocation4 + $0xc0] sm:$0xff]
    %v252 = vld [vmem:[#allocation4 + $0xc8] sm:$0xf]
    %v253 = vld [vmem:[#allocation4 + $0xcc] sm:$0xff]
    %v254 = vld [vmem:[#allocation4 + $0xd4] sm:$0xf]
    %v255 = vld [vmem:[#allocation4 + $0xd8] sm:$0xff]
    %v256 = vld [vmem:[#allocation4 + $0xe0] sm:$0xf]
    %v257 = vld [vmem:[#allocation4 + $0xe4] sm:$0xff]
    %v258 = vld [vmem:[#allocation4 + $0xec] sm:$0xf]
    %v259 = vld [vmem:[#allocation4 + $0xf0] sm:$0xff]
    %v260 = vld [vmem:[#allocation4 + $0xf8] sm:$0xf]
    %v261 = vld [vmem:[#allocation4 + $0xfc] sm:$0xff]
    %v262 = vld [vmem:[#allocation4 + $0x104] sm:$0xf]
    %v263 = vld [vmem:[#allocation4 + $0x108] sm:$0xff]
    %v264 = vld [vmem:[#allocation4 + $0x110] sm:$0xf]
    %v265 = vld [vmem:[#allocation4 + $0x114] sm:$0xff]
    %v266 = vld [vmem:[#allocation4 + $0x11c] sm:$0xf]
    %v267 = vld [vmem:[#allocation4 + $0x120] sm:$0xff]
    %v268 = vld [vmem:[#allocation4 + $0x128] sm:$0xf]
    %v269 = vld [vmem:[#allocation4 + $0x12c] sm:$0xff]
    %v270 = vld [vmem:[#allocation4 + $0x134] sm:$0xf]
    %v271 = vld [vmem:[#allocation4 + $0x138] sm:$0xff]
    %v272 = vld [vmem:[#allocation4 + $0x140] sm:$0xf]
    %v273 = vld [vmem:[#allocation4 + $0x144] sm:$0xff]
    %v274 = vld [vmem:[#allocation4 + $0x14c] sm:$0xf]
    %v275 = vld [vmem:[#allocation4 + $0x150] sm:$0xff]
    %v276 = vld [vmem:[#allocation4 + $0x158] sm:$0xf]
    %v277 = vld [vmem:[#allocation4 + $0x15c] sm:$0xff]
    %v278 = vld [vmem:[#allocation4 + $0x164] sm:$0xf]
    %v279 = vld [vmem:[#allocation4 + $0x168] sm:$0xff]
    %v280 = vld [vmem:[#allocation4 + $0x170] sm:$0xf]
    %v281 = vld [vmem:[#allocation4 + $0x174] sm:$0xff]
    %v282 = vld [vmem:[#allocation4 + $0x17c] sm:$0xf]
    %v283 = vld [vmem:[#allocation4 + $0x180] sm:$0xff]
    %v284 = vld [vmem:[#allocation4 + $0x188] sm:$0xf]
    %v285 = vld [vmem:[#allocation4 + $0x18c] sm:$0xff]
    %v286 = vld [vmem:[#allocation4 + $0x194] sm:$0xf]
    %v287 = vld [vmem:[#allocation4 + $0x198] sm:$0xff]
    %v288 = vld [vmem:[#allocation4 + $0x1a0] sm:$0xf]
    %v289 = vld [vmem:[#allocation4 + $0x1a4] sm:$0xff]
    %v290 = vld [vmem:[#allocation4 + $0x1ac] sm:$0xf]
    %v291 = vld [vmem:[#allocation4 + $0x1b0] sm:$0xff]
    %v292 = vld [vmem:[#allocation4 + $0x1b8] sm:$0xf]
    %v293 = vld [vmem:[#allocation4 + $0x1bc] sm:$0xff]
    %v294 = vld [vmem:[#allocation4 + $0x1c4] sm:$0xf]
    %v295 = vld [vmem:[#allocation4 + $0x1c8] sm:$0xff]
    %v296 = vld [vmem:[#allocation4 + $0x1d0] sm:$0xf]
    %v297 = vld [vmem:[#allocation4 + $0x1d4] sm:$0xff]
    %v298 = vld [vmem:[#allocation4 + $0x1dc] sm:$0xf]
    %v299 = vld [vmem:[#allocation4 + $0x1e0] sm:$0xff]
    %v300 = vld [vmem:[#allocation4 + $0x1e8] sm:$0xf]
    %v301 = vld [vmem:[#allocation4 + $0x1ec] sm:$0xff]
    %v302 = vld [vmem:[#allocation4 + $0x1f4] sm:$0xf]
    %v303 = vld [vmem:[#allocation4 + $0x1f8] sm:$0xff]
    %v304 = vld [vmem:[#allocation4 + $0x200] sm:$0xf]
    %v305 = vld [vmem:[#allocation4 + $0x204] sm:$0xff]
    %v306 = vld [vmem:[#allocation4 + $0x20c] sm:$0xf]
    %v307 = vld [vmem:[#allocation4 + $0x210] sm:$0xff]
    %v308 = vld [vmem:[#allocation4 + $0x218] sm:$0xf]
    %v309 = vld [vmem:[#allocation4 + $0x21c] sm:$0xff]
    %v310 = vld [vmem:[#allocation4 + $0x224] sm:$0xf]
    %v311 = vld [vmem:[#allocation4 + $0x228] sm:$0xff]
    %v312 = vld [vmem:[#allocation4 + $0x230] sm:$0xf]
    %v313 = vld [vmem:[#allocation4 + $0x234] sm:$0xff]
    %v314 = vld [vmem:[#allocation4 + $0x23c] sm:$0xf]
    %v315 = vld [vmem:[#allocation4 + $0x240] sm:$0xff]
    %v316 = vld [vmem:[#allocation4 + $0x248] sm:$0xf]
    %v317 = vld [vmem:[#allocation4 + $0x24c] sm:$0xff]
    %v318 = vld [vmem:[#allocation4 + $0x254] sm:$0xf]
    %v319 = vld [vmem:[#allocation4 + $0x258] sm:$0xff]
    %v320 = vld [vmem:[#allocation4 + $0x260] sm:$0xf]
    %v321 = vld [vmem:[#allocation4 + $0x264] sm:$0xff]
    %v322 = vld [vmem:[#allocation4 + $0x26c] sm:$0xf]
    %v323 = vld [vmem:[#allocation4 + $0x270] sm:$0xff]
    %v324 = vld [vmem:[#allocation4 + $0x278] sm:$0xf]
    %v325 = vld [vmem:[#allocation4 + $0x27c] sm:$0xff]
    %v326 = vld [vmem:[#allocation4 + $0x284] sm:$0xf]
    %v327 = vld [vmem:[#allocation4 + $0x288] sm:$0xff]
    %v328 = vld [vmem:[#allocation4 + $0x290] sm:$0xf]
    %v329 = vld [vmem:[#allocation4 + $0x294] sm:$0xff]
    %v330 = vld [vmem:[#allocation4 + $0x29c] sm:$0xf]
    %v331 = vld [vmem:[#allocation4 + $0x2a0] sm:$0xff]
    %v332 = vld [vmem:[#allocation4 + $0x2a8] sm:$0xf]
    %v333 = vld [vmem:[#allocation4 + $0x2ac] sm:$0xff]
    %v334 = vld [vmem:[#allocation4 + $0x2b4] sm:$0xf]
    %v335 = vld [vmem:[#allocation4 + $0x2b8] sm:$0xff]
    %v336 = vld [vmem:[#allocation4 + $0x2c0] sm:$0xf]
    %v337 = vld [vmem:[#allocation4 + $0x2c4] sm:$0xff]
    %v338 = vld [vmem:[#allocation4 + $0x2cc] sm:$0xf]
    %v339 = vld [vmem:[#allocation4 + $0x2d0] sm:$0xff]
    %v340 = vld [vmem:[#allocation4 + $0x2d8] sm:$0xf]
    %v341 = vld [vmem:[#allocation4 + $0x2dc] sm:$0xff]
    %v342 = vld [vmem:[#allocation4 + $0x2e4] sm:$0xf]
    %v343 = vld [vmem:[#allocation4 + $0x2e8] sm:$0xff]
    %v344 = vld [vmem:[#allocation4 + $0x2f0] sm:$0xf]
    %v345 = vld [vmem:[#allocation4 + $0x2f4] sm:$0xff]
    %v346 = vld [vmem:[#allocation4 + $0x2fc] sm:$0xf]
    %v347 = vld [vmem:[#allocation6] sm:$0x7]
    %v349 = vlaneseq
    %v350 = vshrl.u32 %v349, 7
    %v351 = vsub.s32 0, %v350
    %v352 = vrot.slane %v347, %v351
    %v353 = vlaneseq
    %v354 = vshrl.u32 %v353, 7
    %v355 = vsub.s32 1, %v354
    %v356 = vrot.slane %v347, %v355
    %v357 = vlaneseq
    %v358 = vshrl.u32 %v357, 7
    %v359 = vsub.s32 2, %v358
    %v360 = vrot.slane %v347, %v359
    %v492 = vunpack.c.l.b16 %v219
    %v493 = vunpack.c.h.b16 %v219
    %v494 = vunpack.c.l.b16 %v220
    %v495 = vunpack.c.l.b16 %v221
    %v496 = vunpack.c.h.b16 %v221
    %v497 = vunpack.c.l.b16 %v222
    %v498 = vunpack.c.l.b16 %v223
    %v499 = vunpack.c.h.b16 %v223
    %v500 = vunpack.c.l.b16 %v224
    %v501 = vunpack.c.l.b16 %v225
    %v502 = vunpack.c.h.b16 %v225
    %v503 = vunpack.c.l.b16 %v226
    %v504 = vunpack.c.l.b16 %v227
    %v505 = vunpack.c.h.b16 %v227
    %v506 = vunpack.c.l.b16 %v228
    %v507 = vunpack.c.l.b16 %v229
    %v508 = vunpack.c.h.b16 %v229
    %v509 = vunpack.c.l.b16 %v230
    %v510 = vunpack.c.l.b16 %v231
    %v511 = vunpack.c.h.b16 %v231
    %v512 = vunpack.c.l.b16 %v232
    %v513 = vunpack.c.l.b16 %v233
    %v514 = vunpack.c.h.b16 %v233
    %v515 = vunpack.c.l.b16 %v234
    %v516 = vunpack.c.l.b16 %v235
    %v517 = vunpack.c.h.b16 %v235
    %v518 = vunpack.c.l.b16 %v236
    %v519 = vunpack.c.l.b16 %v237
    %v520 = vunpack.c.h.b16 %v237
    %v521 = vunpack.c.l.b16 %v238
    %v522 = vunpack.c.l.b16 %v239
    %v523 = vunpack.c.h.b16 %v239
    %v524 = vunpack.c.l.b16 %v240
    %v525 = vunpack.c.l.b16 %v241
    %v526 = vunpack.c.h.b16 %v241
    %v527 = vunpack.c.l.b16 %v242
    %v528 = vunpack.c.l.b16 %v243
    %v529 = vunpack.c.h.b16 %v243
    %v530 = vunpack.c.l.b16 %v244
    %v531 = vunpack.c.l.b16 %v245
    %v532 = vunpack.c.h.b16 %v245
    %v533 = vunpack.c.l.b16 %v246
    %v534 = vunpack.c.l.b16 %v247
    %v535 = vunpack.c.h.b16 %v247
    %v536 = vunpack.c.l.b16 %v248
    %v537 = vunpack.c.l.b16 %v249
    %v538 = vunpack.c.h.b16 %v249
    %v539 = vunpack.c.l.b16 %v250
    %v540 = vunpack.c.l.b16 %v251
    %v541 = vunpack.c.h.b16 %v251
    %v542 = vunpack.c.l.b16 %v252
    %v543 = vunpack.c.l.b16 %v253
    %v544 = vunpack.c.h.b16 %v253
    %v545 = vunpack.c.l.b16 %v254
    %v546 = vunpack.c.l.b16 %v255
    %v547 = vunpack.c.h.b16 %v255
    %v548 = vunpack.c.l.b16 %v256
    %v549 = vunpack.c.l.b16 %v257
    %v550 = vunpack.c.h.b16 %v257
    %v551 = vunpack.c.l.b16 %v258
    %v552 = vunpack.c.l.b16 %v259
    %v553 = vunpack.c.h.b16 %v259
    %v554 = vunpack.c.l.b16 %v260
    %v555 = vunpack.c.l.b16 %v261
    %v556 = vunpack.c.h.b16 %v261
    %v557 = vunpack.c.l.b16 %v262
    %v558 = vunpack.c.l.b16 %v263
    %v559 = vunpack.c.h.b16 %v263
    %v560 = vunpack.c.l.b16 %v264
    %v561 = vunpack.c.l.b16 %v265
    %v562 = vunpack.c.h.b16 %v265
    %v563 = vunpack.c.l.b16 %v266
    %v564 = vunpack.c.l.b16 %v267
    %v565 = vunpack.c.h.b16 %v267
    %v566 = vunpack.c.l.b16 %v268
    %v567 = vunpack.c.l.b16 %v269
    %v568 = vunpack.c.h.b16 %v269
    %v569 = vunpack.c.l.b16 %v270
    %v570 = vunpack.c.l.b16 %v271
    %v571 = vunpack.c.h.b16 %v271
    %v572 = vunpack.c.l.b16 %v272
    %v573 = vunpack.c.l.b16 %v273
    %v574 = vunpack.c.h.b16 %v273
    %v575 = vunpack.c.l.b16 %v274
    %v576 = vunpack.c.l.b16 %v275
    %v577 = vunpack.c.h.b16 %v275
    %v578 = vunpack.c.l.b16 %v276
    %v579 = vunpack.c.l.b16 %v277
    %v580 = vunpack.c.h.b16 %v277
    %v581 = vunpack.c.l.b16 %v278
    %v582 = vunpack.c.l.b16 %v279
    %v583 = vunpack.c.h.b16 %v279
    %v584 = vunpack.c.l.b16 %v280
    %v585 = vunpack.c.l.b16 %v281
    %v586 = vunpack.c.h.b16 %v281
    %v587 = vunpack.c.l.b16 %v282
    %v588 = vunpack.c.l.b16 %v283
    %v589 = vunpack.c.h.b16 %v283
    %v590 = vunpack.c.l.b16 %v284
    %v591 = vunpack.c.l.b16 %v285
    %v592 = vunpack.c.h.b16 %v285
    %v593 = vunpack.c.l.b16 %v286
    %v594 = vunpack.c.l.b16 %v287
    %v595 = vunpack.c.h.b16 %v287
    %v596 = vunpack.c.l.b16 %v288
    %v597 = vunpack.c.l.b16 %v289
    %v598 = vunpack.c.h.b16 %v289
    %v599 = vunpack.c.l.b16 %v290
    %v600 = vunpack.c.l.b16 %v291
    %v601 = vunpack.c.h.b16 %v291
    %v602 = vunpack.c.l.b16 %v292
    %v603 = vunpack.c.l.b16 %v293
    %v604 = vunpack.c.h.b16 %v293
    %v605 = vunpack.c.l.b16 %v294
    %v606 = vunpack.c.l.b16 %v295
    %v607 = vunpack.c.h.b16 %v295
    %v608 = vunpack.c.l.b16 %v296
    %v609 = vunpack.c.l.b16 %v297
    %v610 = vunpack.c.h.b16 %v297
    %v611 = vunpack.c.l.b16 %v298
    %v612 = vunpack.c.l.b16 %v299
    %v613 = vunpack.c.h.b16 %v299
    %v614 = vunpack.c.l.b16 %v300
    %v615 = vunpack.c.l.b16 %v301
    %v616 = vunpack.c.h.b16 %v301
    %v617 = vunpack.c.l.b16 %v302
    %v618 = vunpack.c.l.b16 %v303
    %v619 = vunpack.c.h.b16 %v303
    %v620 = vunpack.c.l.b16 %v304
    %v621 = vunpack.c.l.b16 %v305
    %v622 = vunpack.c.h.b16 %v305
    %v623 = vunpack.c.l.b16 %v306
    %v624 = vunpack.c.l.b16 %v307
    %v625 = vunpack.c.h.b16 %v307
    %v626 = vunpack.c.l.b16 %v308
    %v627 = vunpack.c.l.b16 %v309
    %v628 = vunpack.c.h.b16 %v309
    %v629 = vunpack.c.l.b16 %v310
    %v630 = vunpack.c.l.b16 %v311
    %v631 = vunpack.c.h.b16 %v311
    %v632 = vunpack.c.l.b16 %v312
    %v633 = vunpack.c.l.b16 %v313
    %v634 = vunpack.c.h.b16 %v313
    %v635 = vunpack.c.l.b16 %v314
    %v636 = vunpack.c.l.b16 %v315
    %v637 = vunpack.c.h.b16 %v315
    %v638 = vunpack.c.l.b16 %v316
    %v639 = vunpack.c.l.b16 %v317
    %v640 = vunpack.c.h.b16 %v317
    %v641 = vunpack.c.l.b16 %v318
    %v642 = vunpack.c.l.b16 %v319
    %v643 = vunpack.c.h.b16 %v319
    %v644 = vunpack.c.l.b16 %v320
    %v645 = vunpack.c.l.b16 %v321
    %v646 = vunpack.c.h.b16 %v321
    %v647 = vunpack.c.l.b16 %v322
    %v648 = vunpack.c.l.b16 %v323
    %v649 = vunpack.c.h.b16 %v323
    %v650 = vunpack.c.l.b16 %v324
    %v651 = vunpack.c.l.b16 %v325
    %v652 = vunpack.c.h.b16 %v325
    %v653 = vunpack.c.l.b16 %v326
    %v654 = vunpack.c.l.b16 %v327
    %v655 = vunpack.c.h.b16 %v327
    %v656 = vunpack.c.l.b16 %v328
    %v657 = vunpack.c.l.b16 %v329
    %v658 = vunpack.c.h.b16 %v329
    %v659 = vunpack.c.l.b16 %v330
    %v660 = vunpack.c.l.b16 %v331
    %v661 = vunpack.c.h.b16 %v331
    %v662 = vunpack.c.l.b16 %v332
    %v663 = vunpack.c.l.b16 %v333
    %v664 = vunpack.c.h.b16 %v333
    %v665 = vunpack.c.l.b16 %v334
    %v666 = vunpack.c.l.b16 %v335
    %v667 = vunpack.c.h.b16 %v335
    %v668 = vunpack.c.l.b16 %v336
    %v669 = vunpack.c.l.b16 %v337
    %v670 = vunpack.c.h.b16 %v337
    %v671 = vunpack.c.l.b16 %v338
    %v672 = vunpack.c.l.b16 %v339
    %v673 = vunpack.c.h.b16 %v339
    %v674 = vunpack.c.l.b16 %v340
    %v675 = vunpack.c.l.b16 %v341
    %v676 = vunpack.c.h.b16 %v341
    %v677 = vunpack.c.l.b16 %v342
    %v678 = vunpack.c.l.b16 %v343
    %v679 = vunpack.c.h.b16 %v343
    %v680 = vunpack.c.l.b16 %v344
    %v681 = vunpack.c.l.b16 %v345
    %v682 = vunpack.c.h.b16 %v345
    %v683 = vunpack.c.l.b16 %v346
    %v684 = vpack.c.b16 %v495, %v492
    %v685 = vpack.c.b16 %v496, %v493
    %v686 = vpack.c.b16 %v497, %v494
    %v687 = vpack.c.b16 %v501, %v498
    %v688 = vpack.c.b16 %v502, %v499
    %v689 = vpack.c.b16 %v503, %v500
    %v690 = vpack.c.b16 %v507, %v504
    %v691 = vpack.c.b16 %v508, %v505
    %v692 = vpack.c.b16 %v509, %v506
    %v693 = vpack.c.b16 %v513, %v510
    %v694 = vpack.c.b16 %v514, %v511
    %v695 = vpack.c.b16 %v515, %v512
    %v696 = vpack.c.b16 %v519, %v516
    %v697 = vpack.c.b16 %v520, %v517
    %v698 = vpack.c.b16 %v521, %v518
    %v699 = vpack.c.b16 %v525, %v522
    %v700 = vpack.c.b16 %v526, %v523
    %v701 = vpack.c.b16 %v527, %v524
    %v702 = vpack.c.b16 %v531, %v528
    %v703 = vpack.c.b16 %v532, %v529
    %v704 = vpack.c.b16 %v533, %v530
    %v705 = vpack.c.b16 %v537, %v534
    %v706 = vpack.c.b16 %v538, %v535
    %v707 = vpack.c.b16 %v539, %v536
    %v708 = vpack.c.b16 %v543, %v540
    %v709 = vpack.c.b16 %v544, %v541
    %v710 = vpack.c.b16 %v545, %v542
    %v711 = vpack.c.b16 %v549, %v546
    %v712 = vpack.c.b16 %v550, %v547
    %v713 = vpack.c.b16 %v551, %v548
    %v714 = vpack.c.b16 %v555, %v552
    %v715 = vpack.c.b16 %v556, %v553
    %v716 = vpack.c.b16 %v557, %v554
    %v717 = vpack.c.b16 %v561, %v558
    %v718 = vpack.c.b16 %v562, %v559
    %v719 = vpack.c.b16 %v563, %v560
    %v720 = vpack.c.b16 %v567, %v564
    %v721 = vpack.c.b16 %v568, %v565
    %v722 = vpack.c.b16 %v569, %v566
    %v723 = vpack.c.b16 %v573, %v570
    %v724 = vpack.c.b16 %v574, %v571
    %v725 = vpack.c.b16 %v575, %v572
    %v726 = vpack.c.b16 %v579, %v576
    %v727 = vpack.c.b16 %v580, %v577
    %v728 = vpack.c.b16 %v581, %v578
    %v729 = vpack.c.b16 %v585, %v582
    %v730 = vpack.c.b16 %v586, %v583
    %v731 = vpack.c.b16 %v587, %v584
    %v732 = vpack.c.b16 %v591, %v588
    %v733 = vpack.c.b16 %v592, %v589
    %v734 = vpack.c.b16 %v593, %v590
    %v735 = vpack.c.b16 %v597, %v594
    %v736 = vpack.c.b16 %v598, %v595
    %v737 = vpack.c.b16 %v599, %v596
    %v738 = vpack.c.b16 %v603, %v600
    %v739 = vpack.c.b16 %v604, %v601
    %v740 = vpack.c.b16 %v605, %v602
    %v741 = vpack.c.b16 %v609, %v606
    %v742 = vpack.c.b16 %v610, %v607
    %v743 = vpack.c.b16 %v611, %v608
    %v744 = vpack.c.b16 %v615, %v612
    %v745 = vpack.c.b16 %v616, %v613
    %v746 = vpack.c.b16 %v617, %v614
    %v747 = vpack.c.b16 %v621, %v618
    %v748 = vpack.c.b16 %v622, %v619
    %v749 = vpack.c.b16 %v623, %v620
    %v750 = vpack.c.b16 %v627, %v624
    %v751 = vpack.c.b16 %v628, %v625
    %v752 = vpack.c.b16 %v629, %v626
    %v753 = vpack.c.b16 %v633, %v630
    %v754 = vpack.c.b16 %v634, %v631
    %v755 = vpack.c.b16 %v635, %v632
    %v756 = vpack.c.b16 %v639, %v636
    %v757 = vpack.c.b16 %v640, %v637
    %v758 = vpack.c.b16 %v641, %v638
    %v759 = vpack.c.b16 %v645, %v642
    %v760 = vpack.c.b16 %v646, %v643
    %v761 = vpack.c.b16 %v647, %v644
    %v762 = vpack.c.b16 %v651, %v648
    %v763 = vpack.c.b16 %v652, %v649
    %v764 = vpack.c.b16 %v653, %v650
    %v765 = vpack.c.b16 %v657, %v654
    %v766 = vpack.c.b16 %v658, %v655
    %v767 = vpack.c.b16 %v659, %v656
    %v768 = vpack.c.b16 %v663, %v660
    %v769 = vpack.c.b16 %v664, %v661
    %v770 = vpack.c.b16 %v665, %v662
    %v771 = vpack.c.b16 %v669, %v666
    %v772 = vpack.c.b16 %v670, %v667
    %v773 = vpack.c.b16 %v671, %v668
    %v774 = vpack.c.b16 %v675, %v672
    %v775 = vpack.c.b16 %v676, %v673
    %v776 = vpack.c.b16 %v677, %v674
    %v777 = vpack.c.b16 %v681, %v678
    %v778 = vpack.c.b16 %v682, %v679
    %v779 = vpack.c.b16 %v683, %v680
    %876 = vmatprep.subr.bf16.mxu0 %v685
    %877 = vmatpush1.bf16.msra.mxu0 %v684
    %878 = vmatprep.subr.bf16.mxu0 %v688
    %879 = vmatpush1.bf16.msra.mxu0 %v687
    %880 = vmatprep.subr.bf16.mxu0 %v691
    %881 = vmatpush1.bf16.msra.mxu0 %v690
    %882 = vmatprep.subr.bf16.mxu0 %v694
    %883 = vmatpush1.bf16.msra.mxu0 %v693
    %884 = vmatprep.subr.bf16.mxu0 %v697
    %885 = vmatpush1.bf16.msra.mxu0 %v696
    %886 = vmatprep.subr.bf16.mxu0 %v700
    %887 = vmatpush1.bf16.msra.mxu0 %v699
    %888 = vmatprep.subr.bf16.mxu0 %v703
    %889 = vmatpush1.bf16.msra.mxu0 %v702
    %890 = vmatprep.subr.bf16.mxu0 %v706
    %891 = vmatpush1.bf16.msra.mxu0 %v705
    %892 = vmatprep.subr.bf16.mxu0 %v709
    %893 = vmatpush1.bf16.msra.mxu0 %v708
    %894 = vmatprep.subr.bf16.mxu0 %v712
    %895 = vmatpush1.bf16.msra.mxu0 %v711
    %896 = vmatprep.subr.bf16.mxu0 %v715
    %897 = vmatpush1.bf16.msra.mxu0 %v714
    %898 = vmatprep.subr.bf16.mxu0 %v718
    %899 = vmatpush1.bf16.msra.mxu0 %v717
    %900 = vmatprep.subr.bf16.mxu0 %v721
    %901 = vmatpush1.bf16.msra.mxu0 %v720
    %902 = vmatprep.subr.bf16.mxu0 %v724
    %903 = vmatpush1.bf16.msra.mxu0 %v723
    %904 = vmatprep.subr.bf16.mxu0 %v727
    %905 = vmatpush1.bf16.msra.mxu0 %v726
    %906 = vmatprep.subr.bf16.mxu0 %v730
    %907 = vmatpush1.bf16.msra.mxu0 %v729
    %908 = vmatprep.mubr.bf16.mxu0 %v216
    %909 = vmatmul.mubr.bf16.gmra.mrb[0].mxu0 %v215
    %v910 = vpop.f32.mrb[0].mxu0
    %v911 = vadd.f32 %v352, %v910
    %v912 = vpop.f32.mrb[0].mxu0
    %v913 = vadd.f32 %v356, %v912
    %v914 = vpop.f32.mrb[0].mxu0
    %v915 = vpop.f32.mrb[0].mxu0
    %916 = vdwg.mxu0
    %917 = vmatprep.subr.bf16.mxu0 %v733
    %918 = vmatpush1.bf16.msra.mxu0 %v732
    %919 = vmatprep.subr.bf16.mxu0 %v736
    %920 = vmatpush1.bf16.msra.mxu0 %v735
    %921 = vmatprep.subr.bf16.mxu0 %v739
    %922 = vmatpush1.bf16.msra.mxu0 %v738
    %923 = vmatprep.subr.bf16.mxu0 %v742
    %924 = vmatpush1.bf16.msra.mxu0 %v741
    %925 = vmatprep.subr.bf16.mxu0 %v745
    %926 = vmatpush1.bf16.msra.mxu0 %v744
    %927 = vmatprep.subr.bf16.mxu0 %v748
    %928 = vmatpush1.bf16.msra.mxu0 %v747
    %929 = vmatprep.subr.bf16.mxu0 %v751
    %930 = vmatpush1.bf16.msra.mxu0 %v750
    %931 = vmatprep.subr.bf16.mxu0 %v754
    %932 = vmatpush1.bf16.msra.mxu0 %v753
    %933 = vmatprep.subr.bf16.mxu0 %v757
    %934 = vmatpush1.bf16.msra.mxu0 %v756
    %935 = vmatprep.subr.bf16.mxu0 %v760
    %936 = vmatpush1.bf16.msra.mxu0 %v759
    %937 = vmatprep.subr.bf16.mxu0 %v763
    %938 = vmatpush1.bf16.msra.mxu0 %v762
    %939 = vmatprep.subr.bf16.mxu0 %v766
    %940 = vmatpush1.bf16.msra.mxu0 %v765
    %941 = vmatprep.subr.bf16.mxu0 %v769
    %942 = vmatpush1.bf16.msra.mxu0 %v768
    %943 = vmatprep.subr.bf16.mxu0 %v772
    %944 = vmatpush1.bf16.msra.mxu0 %v771
    %945 = vmatprep.subr.bf16.mxu0 %v775
    %946 = vmatpush1.bf16.msra.mxu0 %v774
    %947 = vmatprep.subr.bf16.mxu0 %v778
    %948 = vmatpush1.bf16.msra.mxu0 %v777
    %949 = vmatprep.mubr.bf16.mxu0 %v218
    %950 = vmatmul.mubr.bf16.gmra.mrb[0].mxu0 %v217
    %v951 = vpop.f32.mrb[0].mxu0
    %v952 = vadd.f32 %v911, %v951
    %v953 = vpop.f32.mrb[0].mxu0
    %v954 = vadd.f32 %v913, %v953
    %v955 = vpop.f32.mrb[0].mxu0
    %v956 = vpop.f32.mrb[0].mxu0
    %957 = vdwg.mxu0
    %958 = vmatprep.subr.bf16.mxu0 0
    %959 = vmatpush1.bf16.msra.mxu0 %v686
    %960 = vmatprep.subr.bf16.mxu0 0
    %961 = vmatpush1.bf16.msra.mxu0 %v689
    %962 = vmatprep.subr.bf16.mxu0 0
    %963 = vmatpush1.bf16.msra.mxu0 %v692
    %964 = vmatprep.subr.bf16.mxu0 0
    %965 = vmatpush1.bf16.msra.mxu0 %v695
    %966 = vmatprep.subr.bf16.mxu0 0
    %967 = vmatpush1.bf16.msra.mxu0 %v698
    %968 = vmatprep.subr.bf16.mxu0 0
    %969 = vmatpush1.bf16.msra.mxu0 %v701
    %970 = vmatprep.subr.bf16.mxu0 0
    %971 = vmatpush1.bf16.msra.mxu0 %v704
    %972 = vmatprep.subr.bf16.mxu0 0
    %973 = vmatpush1.bf16.msra.mxu0 %v707
    %974 = vmatprep.subr.bf16.mxu0 0
    %975 = vmatpush1.bf16.msra.mxu0 %v710
    %976 = vmatprep.subr.bf16.mxu0 0
    %977 = vmatpush1.bf16.msra.mxu0 %v713
    %978 = vmatprep.subr.bf16.mxu0 0
    %979 = vmatpush1.bf16.msra.mxu0 %v716
    %980 = vmatprep.subr.bf16.mxu0 0
    %981 = vmatpush1.bf16.msra.mxu0 %v719
    %982 = vmatprep.subr.bf16.mxu0 0
    %983 = vmatpush1.bf16.msra.mxu0 %v722
    %984 = vmatprep.subr.bf16.mxu0 0
    %985 = vmatpush1.bf16.msra.mxu0 %v725
    %986 = vmatprep.subr.bf16.mxu0 0
    %987 = vmatpush1.bf16.msra.mxu0 %v728
    %988 = vmatprep.subr.bf16.mxu0 0
    %989 = vmatpush1.bf16.msra.mxu0 %v731
    %990 = vmatprep.mubr.bf16.mxu0 %v216
    %991 = vmatmul.mubr.bf16.gmra.mrb[0].mxu0 %v215
    %v992 = vpop.f32.mrb[0].mxu0
    %v993 = vadd.f32 %v360, %v992
    %v994 = vpop.f32.mrb[0].mxu0
    %v995 = vpop.f32.mrb[0].mxu0
    %v996 = vpop.f32.mrb[0].mxu0
    %997 = vdwg.mxu0
    %998 = vmatprep.subr.bf16.mxu0 0
    %999 = vmatpush1.bf16.msra.mxu0 %v734
    %1000 = vmatprep.subr.bf16.mxu0 0
    %1001 = vmatpush1.bf16.msra.mxu0 %v737
    %1002 = vmatprep.subr.bf16.mxu0 0
    %1003 = vmatpush1.bf16.msra.mxu0 %v740
    %1004 = vmatprep.subr.bf16.mxu0 0
    %1005 = vmatpush1.bf16.msra.mxu0 %v743
    %1006 = vmatprep.subr.bf16.mxu0 0
    %1007 = vmatpush1.bf16.msra.mxu0 %v746
    %1008 = vmatprep.subr.bf16.mxu0 0
    %1009 = vmatpush1.bf16.msra.mxu0 %v749
    %1010 = vmatprep.subr.bf16.mxu0 0
    %1011 = vmatpush1.bf16.msra.mxu0 %v752
    %1012 = vmatprep.subr.bf16.mxu0 0
    %1013 = vmatpush1.bf16.msra.mxu0 %v755
    %1014 = vmatprep.subr.bf16.mxu0 0
    %1015 = vmatpush1.bf16.msra.mxu0 %v758
    %1016 = vmatprep.subr.bf16.mxu0 0
    %1017 = vmatpush1.bf16.msra.mxu0 %v761
    %1018 = vmatprep.subr.bf16.mxu0 0
    %1019 = vmatpush1.bf16.msra.mxu0 %v764
    %1020 = vmatprep.subr.bf16.mxu0 0
    %1021 = vmatpush1.bf16.msra.mxu0 %v767
    %1022 = vmatprep.subr.bf16.mxu0 0
    %1023 = vmatpush1.bf16.msra.mxu0 %v770
    %1024 = vmatprep.subr.bf16.mxu0 0
    %1025 = vmatpush1.bf16.msra.mxu0 %v773
    %1026 = vmatprep.subr.bf16.mxu0 0
    %1027 = vmatpush1.bf16.msra.mxu0 %v776
    %1028 = vmatprep.subr.bf16.mxu0 0
    %1029 = vmatpush1.bf16.msra.mxu0 %v779
    %1030 = vmatprep.mubr.bf16.mxu0 %v218
    %1031 = vmatmul.mubr.bf16.gmra.mrb[0].mxu0 %v217
    %v1032 = vpop.f32.mrb[0].mxu0
    %v1033 = vadd.f32 %v993, %v1032
    %v1034 = vpop.f32.mrb[0].mxu0
    %v1035 = vpop.f32.mrb[0].mxu0
    %v1036 = vpop.f32.mrb[0].mxu0
    %1037 = vdwg.mxu0
    %v1038 = vtanh.pop %v952
    %v1039 = vtanh.pop %v954
    %v1040 = vtanh.pop %v1033
    %v1041 = vpack.c.bf16 %v1038, %v1038
    %v1042 = vpack.c.bf16 %v1039, %v1039
    %v1043 = vpack.c.bf16 %v1040, %v1040
    %v1044 = vld [vmem:[#allocation7] sm:$0xf]
    %v1045 = vld [vmem:[#allocation7 + $0x4] sm:$0xf]
    %v1046 = vld [vmem:[#allocation7 + $0x8] sm:$0xf]
    %v1047 = vld [vmem:[#allocation7 + $0xc] sm:$0xf]
    %v1048 = vld [vmem:[#allocation7 + $0x10] sm:$0xf]
    %v1049 = vld [vmem:[#allocation7 + $0x14] sm:$0xf]
    %v1050 = vld [vmem:[#allocation7 + $0x18] sm:$0xf]
    %v1051 = vld [vmem:[#allocation7 + $0x1c] sm:$0xf]
    %v1052 = vld [vmem:[#allocation7 + $0x20] sm:$0xf]
    %v1053 = vld [vmem:[#allocation7 + $0x24] sm:$0xf]
    %v1054 = vld [vmem:[#allocation7 + $0x28] sm:$0xf]
    %v1055 = vld [vmem:[#allocation7 + $0x2c] sm:$0xf]
    %v1056 = vld [vmem:[#allocation7 + $0x30] sm:$0xf]
    %v1057 = vld [vmem:[#allocation7 + $0x34] sm:$0xf]
    %v1058 = vld [vmem:[#allocation7 + $0x38] sm:$0xf]
    %v1059 = vld [vmem:[#allocation7 + $0x3c] sm:$0xf]
    %v1060 = vld [vmem:[#allocation7 + $0x40] sm:$0xf]
    %v1061 = vld [vmem:[#allocation7 + $0x44] sm:$0xf]
    %v1062 = vld [vmem:[#allocation7 + $0x48] sm:$0xf]
    %v1063 = vld [vmem:[#allocation7 + $0x4c] sm:$0xf]
    %v1064 = vld [vmem:[#allocation7 + $0x50] sm:$0xf]
    %v1065 = vld [vmem:[#allocation7 + $0x54] sm:$0xf]
    %v1066 = vld [vmem:[#allocation7 + $0x58] sm:$0xf]
    %v1067 = vld [vmem:[#allocation7 + $0x5c] sm:$0xf]
    %v1068 = vld [vmem:[#allocation7 + $0x60] sm:$0xf]
    %v1069 = vld [vmem:[#allocation7 + $0x64] sm:$0xf]
    %v1070 = vld [vmem:[#allocation7 + $0x68] sm:$0xf]
    %v1071 = vld [vmem:[#allocation7 + $0x6c] sm:$0xf]
    %v1072 = vld [vmem:[#allocation7 + $0x70] sm:$0xf]
    %v1073 = vld [vmem:[#allocation7 + $0x74] sm:$0xf]
    %v1074 = vld [vmem:[#allocation7 + $0x78] sm:$0xf]
    %v1075 = vld [vmem:[#allocation7 + $0x7c] sm:$0xf]
    %v1076 = vld [vmem:[#allocation7 + $0x80] sm:$0xf]
    %v1077 = vld [vmem:[#allocation7 + $0x84] sm:$0xf]
    %v1078 = vld [vmem:[#allocation7 + $0x88] sm:$0xf]
    %v1079 = vld [vmem:[#allocation7 + $0x8c] sm:$0xf]
    %v1080 = vld [vmem:[#allocation7 + $0x90] sm:$0xf]
    %v1081 = vld [vmem:[#allocation7 + $0x94] sm:$0xf]
    %v1082 = vld [vmem:[#allocation7 + $0x98] sm:$0xf]
    %v1083 = vld [vmem:[#allocation7 + $0x9c] sm:$0xf]
    %v1084 = vld [vmem:[#allocation7 + $0xa0] sm:$0xf]
    %v1085 = vld [vmem:[#allocation7 + $0xa4] sm:$0xf]
    %v1086 = vld [vmem:[#allocation7 + $0xa8] sm:$0xf]
    %v1087 = vld [vmem:[#allocation7 + $0xac] sm:$0xf]
    %v1088 = vld [vmem:[#allocation7 + $0xb0] sm:$0xf]
    %v1089 = vld [vmem:[#allocation7 + $0xb4] sm:$0xf]
    %v1090 = vld [vmem:[#allocation7 + $0xb8] sm:$0xf]
    %v1091 = vld [vmem:[#allocation7 + $0xbc] sm:$0xf]
    %v1092 = vld [vmem:[%s6] sm:$0x1]
    %v1094 = vlaneseq
    %v1095 = vshrl.u32 %v1094, 7
    %v1096 = vsub.s32 0, %v1095
    %v1097 = vrot.slane %v1092, %v1096
    %v1147 = vunpack.c.l.b16 %v1044
    %v1148 = vunpack.c.l.b16 %v1045
    %v1149 = vunpack.c.l.b16 %v1046
    %v1150 = vunpack.c.l.b16 %v1047
    %v1151 = vunpack.c.l.b16 %v1048
    %v1152 = vunpack.c.l.b16 %v1049
    %v1153 = vunpack.c.l.b16 %v1050
    %v1154 = vunpack.c.l.b16 %v1051
    %v1155 = vunpack.c.l.b16 %v1052
    %v1156 = vunpack.c.l.b16 %v1053
    %v1157 = vunpack.c.l.b16 %v1054
    %v1158 = vunpack.c.l.b16 %v1055
    %v1159 = vunpack.c.l.b16 %v1056
    %v1160 = vunpack.c.l.b16 %v1057
    %v1161 = vunpack.c.l.b16 %v1058
    %v1162 = vunpack.c.l.b16 %v1059
    %v1163 = vunpack.c.l.b16 %v1060
    %v1164 = vunpack.c.l.b16 %v1061
    %v1165 = vunpack.c.l.b16 %v1062
    %v1166 = vunpack.c.l.b16 %v1063
    %v1167 = vunpack.c.l.b16 %v1064
    %v1168 = vunpack.c.l.b16 %v1065
    %v1169 = vunpack.c.l.b16 %v1066
    %v1170 = vunpack.c.l.b16 %v1067
    %v1171 = vunpack.c.l.b16 %v1068
    %v1172 = vunpack.c.l.b16 %v1069
    %v1173 = vunpack.c.l.b16 %v1070
    %v1174 = vunpack.c.l.b16 %v1071
    %v1175 = vunpack.c.l.b16 %v1072
    %v1176 = vunpack.c.l.b16 %v1073
    %v1177 = vunpack.c.l.b16 %v1074
    %v1178 = vunpack.c.l.b16 %v1075
    %v1179 = vunpack.c.l.b16 %v1076
    %v1180 = vunpack.c.l.b16 %v1077
    %v1181 = vunpack.c.l.b16 %v1078
    %v1182 = vunpack.c.l.b16 %v1079
    %v1183 = vunpack.c.l.b16 %v1080
    %v1184 = vunpack.c.l.b16 %v1081
    %v1185 = vunpack.c.l.b16 %v1082
    %v1186 = vunpack.c.l.b16 %v1083
    %v1187 = vunpack.c.l.b16 %v1084
    %v1188 = vunpack.c.l.b16 %v1085
    %v1189 = vunpack.c.l.b16 %v1086
    %v1190 = vunpack.c.l.b16 %v1087
    %v1191 = vunpack.c.l.b16 %v1088
    %v1192 = vunpack.c.l.b16 %v1089
    %v1193 = vunpack.c.l.b16 %v1090
    %v1194 = vunpack.c.l.b16 %v1091
    %v1195 = vpack.c.b16 %v1148, %v1147
    %v1196 = vpack.c.b16 %v1150, %v1149
    %v1197 = vpack.c.b16 %v1152, %v1151
    %v1198 = vpack.c.b16 %v1154, %v1153
    %v1199 = vpack.c.b16 %v1156, %v1155
    %v1200 = vpack.c.b16 %v1158, %v1157
    %v1201 = vpack.c.b16 %v1160, %v1159
    %v1202 = vpack.c.b16 %v1162, %v1161
    %v1203 = vpack.c.b16 %v1164, %v1163
    %v1204 = vpack.c.b16 %v1166, %v1165
    %v1205 = vpack.c.b16 %v1168, %v1167
    %v1206 = vpack.c.b16 %v1170, %v1169
    %v1207 = vpack.c.b16 %v1172, %v1171
    %v1208 = vpack.c.b16 %v1174, %v1173
    %v1209 = vpack.c.b16 %v1176, %v1175
    %v1210 = vpack.c.b16 %v1178, %v1177
    %v1211 = vpack.c.b16 %v1180, %v1179
    %v1212 = vpack.c.b16 %v1182, %v1181
    %v1213 = vpack.c.b16 %v1184, %v1183
    %v1214 = vpack.c.b16 %v1186, %v1185
    %v1215 = vpack.c.b16 %v1188, %v1187
    %v1216 = vpack.c.b16 %v1190, %v1189
    %v1217 = vpack.c.b16 %v1192, %v1191
    %v1218 = vpack.c.b16 %v1194, %v1193
    %1243 = vmatprep.subr.bf16.mxu0 0
    %1244 = vmatpush1.bf16.msra.mxu0 %v1195
    %1245 = vmatprep.subr.bf16.mxu0 0
    %1246 = vmatpush1.bf16.msra.mxu0 %v1196
    %1247 = vmatprep.subr.bf16.mxu0 0
    %1248 = vmatpush1.bf16.msra.mxu0 %v1197
    %1249 = vmatprep.subr.bf16.mxu0 0
    %1250 = vmatpush1.bf16.msra.mxu0 %v1198
    %1251 = vmatprep.subr.bf16.mxu0 0
    %1252 = vmatpush1.bf16.msra.mxu0 %v1199
    %1253 = vmatprep.subr.bf16.mxu0 0
    %1254 = vmatpush1.bf16.msra.mxu0 %v1200
    %1255 = vmatprep.subr.bf16.mxu0 0
    %1256 = vmatpush1.bf16.msra.mxu0 %v1201
    %1257 = vmatprep.subr.bf16.mxu0 0
    %1258 = vmatpush1.bf16.msra.mxu0 %v1202
    %1259 = vmatprep.subr.bf16.mxu0 0
    %1260 = vmatpush1.bf16.msra.mxu0 %v1203
    %1261 = vmatprep.subr.bf16.mxu0 0
    %1262 = vmatpush1.bf16.msra.mxu0 %v1204
    %1263 = vmatprep.subr.bf16.mxu0 0
    %1264 = vmatpush1.bf16.msra.mxu0 %v1205
    %1265 = vmatprep.subr.bf16.mxu0 0
    %1266 = vmatpush1.bf16.msra.mxu0 %v1206
    %1267 = vmatprep.subr.bf16.mxu0 0
    %1268 = vmatpush1.bf16.msra.mxu0 %v1207
    %1269 = vmatprep.subr.bf16.mxu0 0
    %1270 = vmatpush1.bf16.msra.mxu0 %v1208
    %1271 = vmatprep.subr.bf16.mxu0 0
    %1272 = vmatpush1.bf16.msra.mxu0 %v1209
    %1273 = vmatprep.subr.bf16.mxu0 0
    %1274 = vmatpush1.bf16.msra.mxu0 %v1210
    %1275 = vmatprep.mubr.bf16.mxu0 %v1042
    %1276 = vmatmul.mubr.bf16.gmra.mrb[0].mxu0 %v1041
    %v1277 = vpop.f32.mrb[0].mxu0
    %v1278 = vadd.f32 %v1097, %v1277
    %v1279 = vpop.f32.mrb[0].mxu0
    %v1280 = vpop.f32.mrb[0].mxu0
    %v1281 = vpop.f32.mrb[0].mxu0
    %1282 = vdwg.mxu0
    %1283 = vmatprep.subr.bf16.mxu0 0
    %1284 = vmatpush1.bf16.msra.mxu0 %v1211
    %1285 = vmatprep.subr.bf16.mxu0 0
    %1286 = vmatpush1.bf16.msra.mxu0 %v1212
    %1287 = vmatprep.subr.bf16.mxu0 0
    %1288 = vmatpush1.bf16.msra.mxu0 %v1213
    %1289 = vmatprep.subr.bf16.mxu0 0
    %1290 = vmatpush1.bf16.msra.mxu0 %v1214
    %1291 = vmatprep.subr.bf16.mxu0 0
    %1292 = vmatpush1.bf16.msra.mxu0 %v1215
    %1293 = vmatprep.subr.bf16.mxu0 0
    %1294 = vmatpush1.bf16.msra.mxu0 %v1216
    %1295 = vmatprep.subr.bf16.mxu0 0
    %1296 = vmatpush1.bf16.msra.mxu0 %v1217
    %1297 = vmatprep.subr.bf16.mxu0 0
    %1298 = vmatpush1.bf16.msra.mxu0 %v1218
    %1299 = vmatprep.subr.bf16.mxu0 0
    %1300 = vmatpush1.bf16.msra.mxu0 0
    %1301 = vmatprep.subr.bf16.mxu0 0
    %1302 = vmatpush1.bf16.msra.mxu0 0
    %1303 = vmatprep.subr.bf16.mxu0 0
    %1304 = vmatpush1.bf16.msra.mxu0 0
    %1305 = vmatprep.subr.bf16.mxu0 0
    %1306 = vmatpush1.bf16.msra.mxu0 0
    %1307 = vmatprep.subr.bf16.mxu0 0
    %1308 = vmatpush1.bf16.msra.mxu0 0
    %1309 = vmatprep.subr.bf16.mxu0 0
    %1310 = vmatpush1.bf16.msra.mxu0 0
    %1311 = vmatprep.subr.bf16.mxu0 0
    %1312 = vmatpush1.bf16.msra.mxu0 0
    %1313 = vmatprep.subr.bf16.mxu0 0
    %1314 = vmatpush1.bf16.msra.mxu0 0
    %1315 = vmatprep.mubr.bf16.mxu0 0
    %1316 = vmatmul.mubr.bf16.gmra.mrb[0].mxu0 %v1043
    %v1317 = vpop.f32.mrb[0].mxu0
    %v1318 = vadd.f32 %v1278, %v1317
    %v1319 = vpop.f32.mrb[0].mxu0
    %v1320 = vpop.f32.mrb[0].mxu0
    %v1321 = vpop.f32.mrb[0].mxu0
    %1322 = vdwg.mxu0
    %1323 = vst [vmem:[%s7] sm:$0xff] %v1318
    // Predicated region
    $region46: #{gaussian_policy_forward.1} parent=1 // pred_check
      _
    $region47: #{gaussian_policy_forward.1} parent=1 // pred_check_branch
      %1325 = sbr.rel (0) target = $region49
    $region48: #{gaussian_policy_forward.1} parent=1 // pred_region
      _
    $region49: #{gaussian_policy_forward.1} parent=1 // pred_fallthru
      _
    // Predicated region
    $region50: #{gaussian_policy_forward.1} parent=1 // pred_check
      _
    $region51: #{gaussian_policy_forward.1} parent=1 // pred_check_branch
      %1327 = sbr.rel (0) target = $region53
    $region52: #{gaussian_policy_forward.1} parent=1 // pred_region
      _
    $region53: #{gaussian_policy_forward.1} parent=1 // pred_fallthru
      _
    %1328 = vsyncpa [#allocation3], 1
    %1329 = vsyncpa [#allocation5], 1
    %1330 = vsyncpa [#allocation8], 1

</llo_original>
